<compile_context>
chip_gen: v6e
topology: v6e:2x2x1
jax: 0.10.0
libtpu: 0.0.40
codegen_flags: <defaults>
</compile_context>

<pallas_src>
import functools

import jax
import jax.numpy as jnp
from jax.experimental import pallas as pl
from jax.experimental.pallas import tpu as pltpu


# ----------------------------------------------------------------------------- #
# Pallas kernel: W(Co,K) @ P(K,TM) + bias + optional LeakyReLU, f32 accumulation
# ----------------------------------------------------------------------------- #
def _mmT_bias_act_kernel(w_ref, p_ref, b_ref, o_ref, *, slope):
    # w_ref: (Co, K) bf16   p_ref: (K, TM) bf16   b_ref: (Co, 1) f32   o_ref: (Co, TM) f32
    acc = jnp.dot(w_ref[...], p_ref[...], preferred_element_type=jnp.float32)
    acc = acc + b_ref[...]  # lane-broadcast of the per-channel bias
    if slope is not None:
        acc = jnp.where(acc >= 0.0, acc, jnp.float32(slope) * acc)
    o_ref[...] = acc


def matmul_t_bias_act(w, p, b, slope=None):
    """out(Co, M) = w(Co, K) @ p(K, M) + b, optionally LeakyReLU, via Pallas."""
    Co, K = w.shape
    K2, M = p.shape
    assert K == K2

    # Tile the lane (M) axis only when it is large and 128-divisible; otherwise a
    # single full-extent block (no padding, no masking beyond what Mosaic needs).
    if M >= 256 and M % 128 == 0:
        tile_m = 128
    else:
        tile_m = M
    grid = (M // tile_m,)

    return pl.pallas_call(
        functools.partial(_mmT_bias_act_kernel, slope=slope),
        out_shape=jax.ShapeDtypeStruct((Co, M), jnp.float32),
        grid=grid,
        in_specs=[
            pl.BlockSpec((Co, K), lambda i: (0, 0)),        # weights resident
            pl.BlockSpec((K, tile_m), lambda i: (0, i)),    # patch columns
            pl.BlockSpec((Co, 1), lambda i: (0, 0)),        # bias
        ],
        out_specs=pl.BlockSpec((Co, tile_m), lambda i: (0, i)),
        compiler_params=pltpu.CompilerParams(
            dimension_semantics=("parallel",),
        ),
    )(w, p, b)


# ----------------------------------------------------------------------------- #
# Plain-JAX glue: im2col for CNHW activations (no transposes)
# ----------------------------------------------------------------------------- #
def im2col_cnhw(x, k, stride, pad):
    # x: (C, N, H, W) -> patches^T (C*k*k, N*OH*OW); K ordering (ci, kh, kw)
    # matches PyTorch's w.reshape(Co, Ci*kh*kw), so no weight permutation needed.
    C, N, H, W = x.shape
    xp = jnp.pad(x, ((0, 0), (0, 0), (pad, pad), (pad, pad)))
    Hp, Wp = H + 2 * pad, W + 2 * pad
    OH = (Hp - k) // stride + 1
    OW = (Wp - k) // stride + 1
    taps = []
    for kh in range(k):
        for kw in range(k):
            taps.append(
                xp[:, :, kh : kh + stride * OH : stride, kw : kw + stride * OW : stride]
            )
    p = jnp.stack(taps, axis=1).reshape(C * k * k, N * OH * OW)
    return p, OH, OW


def conv2d_pallas_cnhw(x, w, b, stride, pad, slope=None):
    """Conv2d (PyTorch semantics) on CNHW activations; returns CNHW output."""
    C, N, H, W = x.shape
    Co, Ci, kh, kw = w.shape
    assert C == Ci and kh == kw
    patches, OH, OW = im2col_cnhw(x, kh, stride, pad)        # (Ci*k*k, N*OH*OW)
    wm = w.reshape(Co, Ci * kh * kw).astype(jnp.bfloat16)    # (Co, K)
    out = matmul_t_bias_act(
        wm, patches.astype(jnp.bfloat16), b.astype(jnp.float32).reshape(Co, 1),
        slope=slope,
    )                                                        # (Co, N*OH*OW) f32
    return out.reshape(Co, N, OH, OW)


# ----------------------------------------------------------------------------- #
# Discriminator parameters + forward
# ----------------------------------------------------------------------------- #
def init_conv_params(key, c_in, c_out, k):
    """Deterministic init mimicking PyTorch Conv2d default (uniform +/- 1/sqrt(fan_in))."""
    kw_key, kb_key = jax.random.split(key)
    fan_in = c_in * k * k
    bound = 1.0 / jnp.sqrt(jnp.float32(fan_in))
    w = jax.random.uniform(kw_key, (c_out, c_in, k, k), jnp.float32, -bound, bound)
    b = jax.random.uniform(kb_key, (c_out,), jnp.float32, -bound, bound)
    return w, b


def init_discriminator_params(key, image_size=32, conv_dim=8, number_of_outputs=1):
    ks = jax.random.split(key, 5)
    return {
        "layer1": init_conv_params(ks[0], 3, conv_dim, 4),
        "layer2": init_conv_params(ks[1], conv_dim, conv_dim * 2, 4),
        "layer3": init_conv_params(ks[2], conv_dim * 2, conv_dim * 4, 4),
        "layer4": init_conv_params(ks[3], conv_dim * 4, conv_dim * 8, 4),
        "layer5": init_conv_params(ks[4], conv_dim * 8, number_of_outputs, image_size // 16),
    }


def discriminator_forward(params, x, number_of_outputs=1):
    slope = 0.05
    # spectral_norm(tensor) in the reference is value-wise identity (see TODO above).
    # One NCHW -> CNHW transpose at entry; all layers stay transpose-free after that.
    out = x.transpose(1, 0, 2, 3)
    out = conv2d_pallas_cnhw(out, *params["layer1"], stride=2, pad=1, slope=slope)
    out = conv2d_pallas_cnhw(out, *params["layer2"], stride=2, pad=1, slope=slope)
    out = conv2d_pallas_cnhw(out, *params["layer3"], stride=2, pad=1, slope=slope)
    out = conv2d_pallas_cnhw(out, *params["layer4"], stride=2, pad=1, slope=slope)

    # self.features = out.view(N, -1) with PyTorch NCHW ordering (c, h, w) per row.
    C4, N, Hh, Ww = out.shape
    features = out.transpose(1, 0, 2, 3).reshape(N, C4 * Hh * Ww)

    # layer5: (N x C4*k*k) x (C4*k*k x n_out) with N=2, n_out=1 — too tiny for the
    # MXU/pallas path (perf review); computed as a fused XLA einsum instead.
    w5, b5 = params["layer5"]
    out5 = jnp.einsum("cnhw,ochw->no", out, w5) + b5

    if number_of_outputs == 1:
        out5 = out5.reshape(-1)
    else:
        out5 = out5.reshape(-1, number_of_outputs)
    return out5, features


if __name__ == "__main__":
    # Small shapes consistent with the module: image_size=32 (so layer5 kernel = 2),
    # conv_dim=8, batch=2, RGB input.
    IMAGE_SIZE = 32
    CONV_DIM = 8
    N_OUT = 1
    BATCH = 2

    key = jax.random.PRNGKey(0)
    pkey, xkey = jax.random.split(key)
    params = init_discriminator_params(pkey, IMAGE_SIZE, CONV_DIM, N_OUT)
    x = jax.random.normal(xkey, (BATCH, 3, IMAGE_SIZE, IMAGE_SIZE), jnp.float32)

    forward = jax.jit(functools.partial(discriminator_forward, number_of_outputs=N_OUT))
    out, features = forward(params, x)
    out = jax.block_until_ready(out)
    features = jax.block_until_ready(features)

    assert out.shape == (BATCH,), out.shape
    assert features.shape == (BATCH, CONV_DIM * 8 * (IMAGE_SIZE // 16) ** 2), features.shape
    assert jnp.all(jnp.isfinite(out)) and jnp.all(jnp.isfinite(features))
    print("KERNEL_OK")
</pallas_src>

<mosaic_0001>
module attributes {stable_mosaic.version = 11 : i64} {
  func.func @_mmT_bias_act_kernel(%arg0: i32, %arg1: memref<8x48xbf16, #tpu.memory_space<vmem>>, %arg2: memref<48x128xbf16, #tpu.memory_space<vmem>>, %arg3: memref<8x1xf32, #tpu.memory_space<vmem>>, %arg4: memref<8x128xf32, #tpu.memory_space<vmem>>) attributes {dimension_semantics = [#tpu.dimension_semantics<parallel>], iteration_bounds = array<i64: 4>, scalar_prefetch = 0 : i64, scratch_operands = 0 : i64, tpu.core_type = #tpu.core_type<tc>, window_params = [{pipeline_mode = #tpu.pipeline_mode<synchronous>, transform_indices = @transform_0, window_bounds = array<i64: 8, 48>}, {transform_indices = @transform_1, window_bounds = array<i64: 48, 128>}, {pipeline_mode = #tpu.pipeline_mode<synchronous>, transform_indices = @transform_2, window_bounds = array<i64: 8, 1>}, {transform_indices = @transform_3, window_bounds = array<i64: 8, 128>}]} {
    %c0 = arith.constant 0 : index
    %c0_0 = arith.constant 0 : index
    %0 = vector.load %arg1[%c0, %c0_0] : memref<8x48xbf16, #tpu.memory_space<vmem>>, vector<8x48xbf16>
    %c0_1 = arith.constant 0 : index
    %c0_2 = arith.constant 0 : index
    %1 = vector.load %arg2[%c0_1, %c0_2] : memref<48x128xbf16, #tpu.memory_space<vmem>>, vector<48x128xbf16>
    %cst = arith.constant dense<0.000000e+00> : vector<8x128xf32>
    %2 = tpu.matmul %0, %1, %cst {dimension_numbers = #tpu.dot_dimension_numbers<[1], [0], [0], [1], [0, 0, 1, 1], [], []>} : vector<8x48xbf16>, vector<48x128xbf16>, vector<8x128xf32> -> vector<8x128xf32>
    %c0_3 = arith.constant 0 : index
    %c0_4 = arith.constant 0 : index
    %3 = vector.load %arg3[%c0_3, %c0_4] : memref<8x1xf32, #tpu.memory_space<vmem>>, vector<8x1xf32>
    %4 = vector.broadcast %3 : vector<8x1xf32> to vector<8x128xf32>
    %5 = arith.addf %2, %4 : vector<8x128xf32>
    %cst_5 = arith.constant 0.000000e+00 : f32
    %6 = vector.broadcast %cst_5 : f32 to vector<8x128xf32>
    %7 = arith.cmpf oge, %5, %6 : vector<8x128xf32>
    %cst_6 = arith.constant 5.000000e-02 : f32
    %8 = vector.broadcast %cst_6 : f32 to vector<8x128xf32>
    %9 = arith.mulf %8, %5 : vector<8x128xf32>
    %10 = arith.select %7, %5, %9 : vector<8x128xi1>, vector<8x128xf32>
    %c0_7 = arith.constant 0 : index
    %c0_8 = arith.constant 0 : index
    %11 = vector.load %arg4[%c0_7, %c0_8] : memref<8x128xf32, #tpu.memory_space<vmem>>, vector<8x128xf32>
    tpu.vector_store %arg4[%c0_7, %c0_8], %10 {strides = array<i32>} : memref<8x128xf32, #tpu.memory_space<vmem>>, vector<8x128xf32>,
    return
  }
  func.func @transform_0(%arg0: i32) -> (i32, i32) {
    %c0_i32 = arith.constant 0 : i32
    %c0_i32_0 = arith.constant 0 : i32
    %c0_i32_1 = arith.constant 0 : i32
    return %c0_i32, %c0_i32_0 : i32, i32
  }
  func.func @transform_1(%arg0: i32) -> (i32, i32) {
    %c0_i32 = arith.constant 0 : i32
    %c0_i32_0 = arith.constant 0 : i32
    return %c0_i32, %arg0 : i32, i32
  }
  func.func @transform_2(%arg0: i32) -> (i32, i32) {
    %c0_i32 = arith.constant 0 : i32
    %c0_i32_0 = arith.constant 0 : i32
    %c0_i32_1 = arith.constant 0 : i32
    return %c0_i32, %c0_i32_0 : i32, i32
  }
  func.func @transform_3(%arg0: i32) -> (i32, i32) {
    %c0_i32 = arith.constant 0 : i32
    %c0_i32_0 = arith.constant 0 : i32
    return %c0_i32, %arg0 : i32, i32
  }
}

module attributes {stable_mosaic.version = 11 : i64} {
  func.func @_mmT_bias_act_kernel(%arg0: i32, %arg1: memref<16x128xbf16, #tpu.memory_space<vmem>>, %arg2: memref<128x128xbf16, #tpu.memory_space<vmem>>, %arg3: memref<16x1xf32, #tpu.memory_space<vmem>>, %arg4: memref<16x128xf32, #tpu.memory_space<vmem>>) attributes {dimension_semantics = [#tpu.dimension_semantics<parallel>], iteration_bounds = array<i64: 1>, scalar_prefetch = 0 : i64, scratch_operands = 0 : i64, tpu.core_type = #tpu.core_type<tc>, window_params = [{pipeline_mode = #tpu.pipeline_mode<synchronous>, transform_indices = @transform_0, window_bounds = array<i64: 16, 128>}, {transform_indices = @transform_1, window_bounds = array<i64: 128, 128>}, {pipeline_mode = #tpu.pipeline_mode<synchronous>, transform_indices = @transform_2, window_bounds = array<i64: 16, 1>}, {transform_indices = @transform_3, window_bounds = array<i64: 16, 128>}]} {
    %c0 = arith.constant 0 : index
    %c0_0 = arith.constant 0 : index
    %0 = vector.load %arg1[%c0, %c0_0] : memref<16x128xbf16, #tpu.memory_space<vmem>>, vector<16x128xbf16>
    %c0_1 = arith.constant 0 : index
    %c0_2 = arith.constant 0 : index
    %1 = vector.load %arg2[%c0_1, %c0_2] : memref<128x128xbf16, #tpu.memory_space<vmem>>, vector<128x128xbf16>
    %cst = arith.constant dense<0.000000e+00> : vector<16x128xf32>
    %2 = tpu.matmul %0, %1, %cst {dimension_numbers = #tpu.dot_dimension_numbers<[1], [0], [0], [1], [0, 0, 1, 1], [], []>} : vector<16x128xbf16>, vector<128x128xbf16>, vector<16x128xf32> -> vector<16x128xf32>
    %c0_3 = arith.constant 0 : index
    %c0_4 = arith.constant 0 : index
    %3 = vector.load %arg3[%c0_3, %c0_4] : memref<16x1xf32, #tpu.memory_space<vmem>>, vector<16x1xf32>
    %4 = vector.broadcast %3 : vector<16x1xf32> to vector<16x128xf32>
    %5 = arith.addf %2, %4 : vector<16x128xf32>
    %cst_5 = arith.constant 0.000000e+00 : f32
    %6 = vector.broadcast %cst_5 : f32 to vector<16x128xf32>
    %7 = arith.cmpf oge, %5, %6 : vector<16x128xf32>
    %cst_6 = arith.constant 5.000000e-02 : f32
    %8 = vector.broadcast %cst_6 : f32 to vector<16x128xf32>
    %9 = arith.mulf %8, %5 : vector<16x128xf32>
    %10 = arith.select %7, %5, %9 : vector<16x128xi1>, vector<16x128xf32>
    %c0_7 = arith.constant 0 : index
    %c0_8 = arith.constant 0 : index
    %11 = vector.load %arg4[%c0_7, %c0_8] : memref<16x128xf32, #tpu.memory_space<vmem>>, vector<16x128xf32>
    tpu.vector_store %arg4[%c0_7, %c0_8], %10 {strides = array<i32>} : memref<16x128xf32, #tpu.memory_space<vmem>>, vector<16x128xf32>,
    return
  }
  func.func @transform_0(%arg0: i32) -> (i32, i32) {
    %c0_i32 = arith.constant 0 : i32
    %c0_i32_0 = arith.constant 0 : i32
    %c0_i32_1 = arith.constant 0 : i32
    return %c0_i32, %c0_i32_0 : i32, i32
  }
  func.func @transform_1(%arg0: i32) -> (i32, i32) {
    %c0_i32 = arith.constant 0 : i32
    %c0_i32_0 = arith.constant 0 : i32
    return %c0_i32, %arg0 : i32, i32
  }
  func.func @transform_2(%arg0: i32) -> (i32, i32) {
    %c0_i32 = arith.constant 0 : i32
    %c0_i32_0 = arith.constant 0 : i32
    %c0_i32_1 = arith.constant 0 : i32
    return %c0_i32, %c0_i32_0 : i32, i32
  }
  func.func @transform_3(%arg0: i32) -> (i32, i32) {
    %c0_i32 = arith.constant 0 : i32
    %c0_i32_0 = arith.constant 0 : i32
    return %c0_i32, %arg0 : i32, i32
  }
}

module attributes {stable_mosaic.version = 11 : i64} {
  func.func @_mmT_bias_act_kernel(%arg0: i32, %arg1: memref<32x256xbf16, #tpu.memory_space<vmem>>, %arg2: memref<256x32xbf16, #tpu.memory_space<vmem>>, %arg3: memref<32x1xf32, #tpu.memory_space<vmem>>, %arg4: memref<32x32xf32, #tpu.memory_space<vmem>>) attributes {dimension_semantics = [#tpu.dimension_semantics<parallel>], iteration_bounds = array<i64: 1>, scalar_prefetch = 0 : i64, scratch_operands = 0 : i64, tpu.core_type = #tpu.core_type<tc>, window_params = [{pipeline_mode = #tpu.pipeline_mode<synchronous>, transform_indices = @transform_0, window_bounds = array<i64: 32, 256>}, {transform_indices = @transform_1, window_bounds = array<i64: 256, 32>}, {pipeline_mode = #tpu.pipeline_mode<synchronous>, transform_indices = @transform_2, window_bounds = array<i64: 32, 1>}, {transform_indices = @transform_3, window_bounds = array<i64: 32, 32>}]} {
    %c0 = arith.constant 0 : index
    %c0_0 = arith.constant 0 : index
    %0 = vector.load %arg1[%c0, %c0_0] : memref<32x256xbf16, #tpu.memory_space<vmem>>, vector<32x256xbf16>
    %c0_1 = arith.constant 0 : index
    %c0_2 = arith.constant 0 : index
    %1 = vector.load %arg2[%c0_1, %c0_2] : memref<256x32xbf16, #tpu.memory_space<vmem>>, vector<256x32xbf16>
    %cst = arith.constant dense<0.000000e+00> : vector<32x32xf32>
    %2 = tpu.matmul %0, %1, %cst {dimension_numbers = #tpu.dot_dimension_numbers<[1], [0], [0], [1], [0, 0, 1, 1], [], []>} : vector<32x256xbf16>, vector<256x32xbf16>, vector<32x32xf32> -> vector<32x32xf32>
    %c0_3 = arith.constant 0 : index
    %c0_4 = arith.constant 0 : index
    %3 = vector.load %arg3[%c0_3, %c0_4] : memref<32x1xf32, #tpu.memory_space<vmem>>, vector<32x1xf32>
    %4 = vector.broadcast %3 : vector<32x1xf32> to vector<32x32xf32>
    %5 = arith.addf %2, %4 : vector<32x32xf32>
    %cst_5 = arith.constant 0.000000e+00 : f32
    %6 = vector.broadcast %cst_5 : f32 to vector<32x32xf32>
    %7 = arith.cmpf oge, %5, %6 : vector<32x32xf32>
    %cst_6 = arith.constant 5.000000e-02 : f32
    %8 = vector.broadcast %cst_6 : f32 to vector<32x32xf32>
    %9 = arith.mulf %8, %5 : vector<32x32xf32>
    %10 = arith.select %7, %5, %9 : vector<32x32xi1>, vector<32x32xf32>
    %c0_7 = arith.constant 0 : index
    %c0_8 = arith.constant 0 : index
    %11 = vector.load %arg4[%c0_7, %c0_8] : memref<32x32xf32, #tpu.memory_space<vmem>>, vector<32x32xf32>
    tpu.vector_store %arg4[%c0_7, %c0_8], %10 {strides = array<i32>} : memref<32x32xf32, #tpu.memory_space<vmem>>, vector<32x32xf32>,
    return
  }
  func.func @transform_0(%arg0: i32) -> (i32, i32) {
    %c0_i32 = arith.constant 0 : i32
    %c0_i32_0 = arith.constant 0 : i32
    %c0_i32_1 = arith.constant 0 : i32
    return %c0_i32, %c0_i32_0 : i32, i32
  }
  func.func @transform_1(%arg0: i32) -> (i32, i32) {
    %c0_i32 = arith.constant 0 : i32
    %c0_i32_0 = arith.constant 0 : i32
    return %c0_i32, %arg0 : i32, i32
  }
  func.func @transform_2(%arg0: i32) -> (i32, i32) {
    %c0_i32 = arith.constant 0 : i32
    %c0_i32_0 = arith.constant 0 : i32
    %c0_i32_1 = arith.constant 0 : i32
    return %c0_i32, %c0_i32_0 : i32, i32
  }
  func.func @transform_3(%arg0: i32) -> (i32, i32) {
    %c0_i32 = arith.constant 0 : i32
    %c0_i32_0 = arith.constant 0 : i32
    return %c0_i32, %arg0 : i32, i32
  }
}

module attributes {stable_mosaic.version = 11 : i64} {
  func.func @_mmT_bias_act_kernel(%arg0: i32, %arg1: memref<64x512xbf16, #tpu.memory_space<vmem>>, %arg2: memref<512x8xbf16, #tpu.memory_space<vmem>>, %arg3: memref<64x1xf32, #tpu.memory_space<vmem>>, %arg4: memref<64x8xf32, #tpu.memory_space<vmem>>) attributes {dimension_semantics = [#tpu.dimension_semantics<parallel>], iteration_bounds = array<i64: 1>, scalar_prefetch = 0 : i64, scratch_operands = 0 : i64, tpu.core_type = #tpu.core_type<tc>, window_params = [{pipeline_mode = #tpu.pipeline_mode<synchronous>, transform_indices = @transform_0, window_bounds = array<i64: 64, 512>}, {transform_indices = @transform_1, window_bounds = array<i64: 512, 8>}, {pipeline_mode = #tpu.pipeline_mode<synchronous>, transform_indices = @transform_2, window_bounds = array<i64: 64, 1>}, {transform_indices = @transform_3, window_bounds = array<i64: 64, 8>}]} {
    %c0 = arith.constant 0 : index
    %c0_0 = arith.constant 0 : index
    %0 = vector.load %arg1[%c0, %c0_0] : memref<64x512xbf16, #tpu.memory_space<vmem>>, vector<64x512xbf16>
    %c0_1 = arith.constant 0 : index
    %c0_2 = arith.constant 0 : index
    %1 = vector.load %arg2[%c0_1, %c0_2] : memref<512x8xbf16, #tpu.memory_space<vmem>>, vector<512x8xbf16>
    %cst = arith.constant dense<0.000000e+00> : vector<64x8xf32>
    %2 = tpu.matmul %0, %1, %cst {dimension_numbers = #tpu.dot_dimension_numbers<[1], [0], [0], [1], [0, 0, 1, 1], [], []>} : vector<64x512xbf16>, vector<512x8xbf16>, vector<64x8xf32> -> vector<64x8xf32>
    %c0_3 = arith.constant 0 : index
    %c0_4 = arith.constant 0 : index
    %3 = vector.load %arg3[%c0_3, %c0_4] : memref<64x1xf32, #tpu.memory_space<vmem>>, vector<64x1xf32>
    %4 = vector.broadcast %3 : vector<64x1xf32> to vector<64x8xf32>
    %5 = arith.addf %2, %4 : vector<64x8xf32>
    %cst_5 = arith.constant 0.000000e+00 : f32
    %6 = vector.broadcast %cst_5 : f32 to vector<64x8xf32>
    %7 = arith.cmpf oge, %5, %6 : vector<64x8xf32>
    %cst_6 = arith.constant 5.000000e-02 : f32
    %8 = vector.broadcast %cst_6 : f32 to vector<64x8xf32>
    %9 = arith.mulf %8, %5 : vector<64x8xf32>
    %10 = arith.select %7, %5, %9 : vector<64x8xi1>, vector<64x8xf32>
    %c0_7 = arith.constant 0 : index
    %c0_8 = arith.constant 0 : index
    %11 = vector.load %arg4[%c0_7, %c0_8] : memref<64x8xf32, #tpu.memory_space<vmem>>, vector<64x8xf32>
    tpu.vector_store %arg4[%c0_7, %c0_8], %10 {strides = array<i32>} : memref<64x8xf32, #tpu.memory_space<vmem>>, vector<64x8xf32>,
    return
  }
  func.func @transform_0(%arg0: i32) -> (i32, i32) {
    %c0_i32 = arith.constant 0 : i32
    %c0_i32_0 = arith.constant 0 : i32
    %c0_i32_1 = arith.constant 0 : i32
    return %c0_i32, %c0_i32_0 : i32, i32
  }
  func.func @transform_1(%arg0: i32) -> (i32, i32) {
    %c0_i32 = arith.constant 0 : i32
    %c0_i32_0 = arith.constant 0 : i32
    return %c0_i32, %arg0 : i32, i32
  }
  func.func @transform_2(%arg0: i32) -> (i32, i32) {
    %c0_i32 = arith.constant 0 : i32
    %c0_i32_0 = arith.constant 0 : i32
    %c0_i32_1 = arith.constant 0 : i32
    return %c0_i32, %c0_i32_0 : i32, i32
  }
  func.func @transform_3(%arg0: i32) -> (i32, i32) {
    %c0_i32 = arith.constant 0 : i32
    %c0_i32_0 = arith.constant 0 : i32
    return %c0_i32, %arg0 : i32, i32
  }
}

</mosaic_0001>

<llo_original>
// kernel: discriminator_forward.4
$region0: #{discriminator_forward.4}
  #allocation0 [shape = 'u32[]', space=smem, size = 0x4, offset = 0x4, fixed_abs, tag = 'smem constant byte address 0x4 - core index']
  #allocation1 [shape = 'u32[144,128]{1,0:T(1,128)}', space=vmem, size = 0x12000, scoped, tag = 'internal scratch']
  %s0 = inlined_call_operand.vmem [shape: bf16[8,48], index: 0, kind: input, shape index: {}]
  %s1 = inlined_call_operand.vmem [shape: bf16[48,512], index: 1, kind: input, shape index: {}]
  %s2 = inlined_call_operand.vmem [shape: f32[8,1], index: 2, kind: input, shape index: {}]
  %s3 = inlined_call_operand.vmem [shape: f32[8,512], index: 3, kind: output, shape index: {}]
  %s4 = sld [smem:[#allocation0]]
  $region86: #{discriminator_forward.4} parent=0
    _
  %s6 = ssub.s32 1, %s4
  %s7 = scalar_select 0, %s6, %s4
  $region1: #{discriminator_forward.4} parent=0
    #allocation2 [shape = 'u8[24576]{0}', space=vmem, size = 0x6000, scoped, tag = 'input window, operand 1']
    loop: start=0, step=1, limit=6
    $region2: #{discriminator_forward.4} parent=1 // loop_pre_header
      _
    $region3: #{discriminator_forward.4} parent=1 // loop_header
      %s9 = sphi 0, %s13
      %p10 = scmp.ge.s32.totalorder %s9, 6
      %s17 = sphi 0, %s17
      %s19 = sphi 0, %s17
      %s20 = sphi 0, %s19
      %s34 = sphi 0, %s20
      %s40 = sphi 0, %s42
      %s43 = sphi 0, %s40
      %s44 = sphi 0, %s43
      %s60 = sphi 0, %s44
      %s64 = sphi 0, %s64
      %s66 = sphi 0, %s64
      %s67 = sphi 0, %s66
      %s81 = sphi 0, %s67
      %s87 = sphi 0, %s89
      %s90 = sphi 0, %s87
      %s91 = sphi 0, %s90
      %s107 = sphi 0, %s91
    $region4: #{discriminator_forward.4} parent=1 // loop_header_branch
      %12 = sbr.rel (%p10) target = $region8
    $region5: #{discriminator_forward.4} parent=1 // loop_body
      %s14 = ssub.s32 %s9, 1
      %s15 = ssub.s32 %s9, 2
      %s16 = sadd.s32 %s9, 1
      %s18 = sadd.s32 %s17, 1
      %p21 = scmp.eq.s32.totalorder %s9, 3
      %p22 = scmp.ne.s32.totalorder %s17, %s19
      %p23 = scmp.eq.s32.totalorder %s9, 0
      %p24 = por %p22, %p23
      %p25 = scmp.ne.s32.totalorder %s17, %s19
      %p26 = scmp.eq.s32.totalorder %s14, 3
      %p27 = por %p25, %p26
      %p28 = scmp.ne.s32.totalorder %s19, %s20
      %p29 = scmp.eq.s32.totalorder %s14, 0
      %p30 = por %p28, %p29
      %p31 = scmp.ne.s32.totalorder %s19, %s20
      %p32 = scmp.eq.s32.totalorder %s15, 3
      %p33 = por %p31, %p32
      %p35 = scmp.ne.s32.totalorder %s20, %s34
      %p36 = scmp.eq.s32.totalorder %s15, 0
      %p37 = por %p35, %p36
      %s38 = ssub.s32 %s9, %s16
      %p39 = scmp.eq.s32.totalorder %s38, 0
      %s41 = sadd.s32 %s40, 1
      %s42 = scalar_select %p39, %s40, %s41
      %p45 = pneg %p39
      %p46 = scmp.eq.s32.totalorder %s9, 3
      %p47 = por %p45, %p46
      %p48 = scmp.ne.s32.totalorder %s40, %s43
      %p49 = scmp.eq.s32.totalorder %s9, 0
      %p50 = por %p48, %p49
      %p51 = scmp.ne.s32.totalorder %s40, %s43
      %p52 = scmp.eq.s32.totalorder %s14, 3
      %p53 = por %p51, %p52
      %p54 = scmp.ne.s32.totalorder %s43, %s44
      %p55 = scmp.eq.s32.totalorder %s14, 0
      %p56 = por %p54, %p55
      %p57 = scmp.ne.s32.totalorder %s43, %s44
      %p58 = scmp.eq.s32.totalorder %s15, 3
      %p59 = por %p57, %p58
      %p61 = scmp.ne.s32.totalorder %s44, %s60
      %p62 = scmp.eq.s32.totalorder %s15, 0
      %p63 = por %p61, %p62
      %s65 = sadd.s32 %s64, 1
      %p68 = scmp.eq.s32.totalorder %s9, 3
      %p69 = scmp.ne.s32.totalorder %s64, %s66
      %p70 = scmp.eq.s32.totalorder %s9, 0
      %p71 = por %p69, %p70
      %p72 = scmp.ne.s32.totalorder %s64, %s66
      %p73 = scmp.eq.s32.totalorder %s14, 3
      %p74 = por %p72, %p73
      %p75 = scmp.ne.s32.totalorder %s66, %s67
      %p76 = scmp.eq.s32.totalorder %s14, 0
      %p77 = por %p75, %p76
      %p78 = scmp.ne.s32.totalorder %s66, %s67
      %p79 = scmp.eq.s32.totalorder %s15, 3
      %p80 = por %p78, %p79
      %p82 = scmp.ne.s32.totalorder %s67, %s81
      %p83 = scmp.eq.s32.totalorder %s15, 0
      %p84 = por %p82, %p83
      %s85 = ssub.s32 %s9, %s16
      %p86 = scmp.eq.s32.totalorder %s85, 0
      %s88 = sadd.s32 %s87, 1
      %s89 = scalar_select %p86, %s87, %s88
      %p92 = pneg %p86
      %p93 = scmp.eq.s32.totalorder %s9, 3
      %p94 = por %p92, %p93
      %p95 = scmp.ne.s32.totalorder %s87, %s90
      %p96 = scmp.eq.s32.totalorder %s9, 0
      %p97 = por %p95, %p96
      %p98 = scmp.ne.s32.totalorder %s87, %s90
      %p99 = scmp.eq.s32.totalorder %s14, 3
      %p100 = por %p98, %p99
      %p101 = scmp.ne.s32.totalorder %s90, %s91
      %p102 = scmp.eq.s32.totalorder %s14, 0
      %p103 = por %p101, %p102
      %p104 = scmp.ne.s32.totalorder %s90, %s91
      %p105 = scmp.eq.s32.totalorder %s15, 3
      %p106 = por %p104, %p105
      %p108 = scmp.ne.s32.totalorder %s91, %s107
      %p109 = scmp.eq.s32.totalorder %s15, 0
      %p110 = por %p108, %p109
      %p111 = scmp.le.s32.totalorder 1, %s9
      %p112 = scmp.lt.s32.totalorder %s9, 5
      %p113 = pnand %p111, %p112
      %p114 = pneg %p113
      // Predicated region
      $region9: #{discriminator_forward.4} parent=5 // pred_check
        _
      $region10: #{discriminator_forward.4} parent=5 // pred_check_branch
        %116 = sbr.rel (%p113) target = $region12
      $region11: #{discriminator_forward.4} parent=5 // pred_region
        %s117 = ssub.s32 %s9, 1
        // Predicated region
        $region13: #{discriminator_forward.4} parent=11 // pred_check
          %p118 = pneg %p30
        $region14: #{discriminator_forward.4} parent=11 // pred_check_branch
          %120 = sbr.rel (%p118) target = $region16
        $region15: #{discriminator_forward.4} parent=11 // pred_region
          _
        $region16: #{discriminator_forward.4} parent=11 // pred_fallthru
          _
        // Predicated region
        $region17: #{discriminator_forward.4} parent=11 // pred_check
          %p121 = pneg %p77
        $region18: #{discriminator_forward.4} parent=11 // pred_check_branch
          %123 = sbr.rel (%p121) target = $region20
        $region19: #{discriminator_forward.4} parent=11 // pred_region
          _
        $region20: #{discriminator_forward.4} parent=11 // pred_fallthru
          _
      $region12: #{discriminator_forward.4} parent=5 // pred_fallthru
        _
      %p124 = scmp.lt.s32.totalorder %s9, 4
      // Predicated region
      $region21: #{discriminator_forward.4} parent=5 // pred_check
        %p125 = pneg %p124
      $region22: #{discriminator_forward.4} parent=5 // pred_check_branch
        %127 = sbr.rel (%p125) target = $region24
      $region23: #{discriminator_forward.4} parent=5 // pred_region
        // Predicated region
        $region25: #{discriminator_forward.4} parent=23 // pred_check
          %p128 = pneg %p50
        $region26: #{discriminator_forward.4} parent=23 // pred_check_branch
          %130 = sbr.rel (%p128) target = $region28
        $region27: #{discriminator_forward.4} parent=23 // pred_region
          %s131 = sand.u32 %s40, 1
          %s132 = sand.u32 %s40, 1
          %s133 = smul.addr %s132, 24
          %s134 = scalar_lea.vmem [#allocation2], %s133
          %s135 = smul.addr %s9, 4
          %s136 = scalar_lea.vmem %s1, %s135
          // Predicated region
          $region29: #{discriminator_forward.4} parent=27 // pred_check
            _
          $region30: #{discriminator_forward.4} parent=27 // pred_check_branch
            %138 = sbr.rel (0) target = $region32
          $region31: #{discriminator_forward.4} parent=27 // pred_region
            // Predicated region
            $region33: #{discriminator_forward.4} parent=31 // pred_check
              _
            $region34: #{discriminator_forward.4} parent=31 // pred_check_branch
              %140 = sbr.rel target = $region36
            $region35: #{discriminator_forward.4} parent=31 // pred_region
              // Predicated region
              $region48: #{discriminator_forward.4} parent=35 // pred_check
                _
              $region49: #{discriminator_forward.4} parent=35 // pred_check_branch
                %166 = sbr.rel (0) target = $region51
              $region50: #{discriminator_forward.4} parent=35 // pred_region
                loop: start=0, step=1, limit=1
                $region52: #{discriminator_forward.4} parent=50 // loop_pre_header
                  _
                $region53: #{discriminator_forward.4} parent=50 // loop_header
                  %s168 = sphi 0, %s172
                  %p169 = scmp.ge.s32.totalorder %s168, 1
                  %s173 = sphi %s136, %s136
                  %s174 = sphi %s134, %s134
                $region54: #{discriminator_forward.4} parent=50 // loop_header_branch
                  %171 = sbr.rel (%p169) target = $region58
                $region55: #{discriminator_forward.4} parent=50 // loop_body
                  _
                $region56: #{discriminator_forward.4} parent=50 // loop_footer
                  %s172 = sadd.s32 1, %s168
                $region57: #{discriminator_forward.4} parent=50 // loop_footer_branch
                  %167 = sbr.rel target = $region53
                $region58: #{discriminator_forward.4} parent=50 // loop_exit
                  _
                %s176 = ssub.s32 16, 1
                loop: start=0, step=1, limit=1
                $region59: #{discriminator_forward.4} parent=50 // loop_pre_header
                  _
                $region60: #{discriminator_forward.4} parent=50 // loop_header
                  %s178 = sphi 0, %s182
                  %p179 = scmp.ge.s32.totalorder %s178, 1
                  %s183 = sphi %s136, %s136
                  %s184 = sphi %s134, %s134
                $region61: #{discriminator_forward.4} parent=50 // loop_header_branch
                  %181 = sbr.rel (%p179) target = $region65
                $region62: #{discriminator_forward.4} parent=50 // loop_body
                  %v185 = vld [vmem:[%s183] sm:%s176]
                  %186 = vst [vmem:[%s184] sm:%s176] %v185
                  %v187 = vld [vmem:[%s183 + $0x10] sm:%s176]
                  %188 = vst [vmem:[%s184 + $0x4] sm:%s176] %v187
                  %v189 = vld [vmem:[%s183 + $0x20] sm:%s176]
                  %190 = vst [vmem:[%s184 + $0x8] sm:%s176] %v189
                  %v191 = vld [vmem:[%s183 + $0x30] sm:%s176]
                  %192 = vst [vmem:[%s184 + $0xc] sm:%s176] %v191
                  %v193 = vld [vmem:[%s183 + $0x40] sm:%s176]
                  %194 = vst [vmem:[%s184 + $0x10] sm:%s176] %v193
                  %v195 = vld [vmem:[%s183 + $0x50] sm:%s176]
                  %196 = vst [vmem:[%s184 + $0x14] sm:%s176] %v195
                $region63: #{discriminator_forward.4} parent=50 // loop_footer
                  %s182 = sadd.s32 1, %s178
                $region64: #{discriminator_forward.4} parent=50 // loop_footer_branch
                  %177 = sbr.rel target = $region60
                $region65: #{discriminator_forward.4} parent=50 // loop_exit
                  _
              $region51: #{discriminator_forward.4} parent=35 // pred_fallthru
                _
            $region36: #{discriminator_forward.4} parent=31 // pred_fallthru
              _
            // Predicated region
            $region37: #{discriminator_forward.4} parent=31 // pred_check
              _
            $region38: #{discriminator_forward.4} parent=31 // pred_check_branch
              %142 = sbr.rel (0) target = $region40
            $region39: #{discriminator_forward.4} parent=31 // pred_region
              %s144 = ssub.s32 16, 1
              loop: start=0, step=1, limit=1
              $region41: #{discriminator_forward.4} parent=39 // loop_pre_header
                _
              $region42: #{discriminator_forward.4} parent=39 // loop_header
                %s146 = sphi 0, %s150
                %p147 = scmp.ge.s32.totalorder %s146, 1
                %s151 = sphi %s136, %s136
                %s152 = sphi %s134, %s134
              $region43: #{discriminator_forward.4} parent=39 // loop_header_branch
                %149 = sbr.rel (%p147) target = $region47
              $region44: #{discriminator_forward.4} parent=39 // loop_body
                %v153 = vld [vmem:[%s151] sm:%s144]
                %154 = vst [vmem:[%s152] sm:%s144] %v153
                %v155 = vld [vmem:[%s151 + $0x10] sm:%s144]
                %156 = vst [vmem:[%s152 + $0x4] sm:%s144] %v155
                %v157 = vld [vmem:[%s151 + $0x20] sm:%s144]
                %158 = vst [vmem:[%s152 + $0x8] sm:%s144] %v157
                %v159 = vld [vmem:[%s151 + $0x30] sm:%s144]
                %160 = vst [vmem:[%s152 + $0xc] sm:%s144] %v159
                %v161 = vld [vmem:[%s151 + $0x40] sm:%s144]
                %162 = vst [vmem:[%s152 + $0x10] sm:%s144] %v161
                %v163 = vld [vmem:[%s151 + $0x50] sm:%s144]
                %164 = vst [vmem:[%s152 + $0x14] sm:%s144] %v163
              $region45: #{discriminator_forward.4} parent=39 // loop_footer
                %s150 = sadd.s32 1, %s146
              $region46: #{discriminator_forward.4} parent=39 // loop_footer_branch
                %145 = sbr.rel target = $region42
              $region47: #{discriminator_forward.4} parent=39 // loop_exit
                _
            $region40: #{discriminator_forward.4} parent=31 // pred_fallthru
              _
          $region32: #{discriminator_forward.4} parent=27 // pred_fallthru
            _
          %197 = vnop
        $region28: #{discriminator_forward.4} parent=23 // pred_fallthru
          _
      $region24: #{discriminator_forward.4} parent=5 // pred_fallthru
        _
      %p198 = scmp.le.s32.totalorder 1, %s9
      %p199 = scmp.lt.s32.totalorder %s9, 5
      %p200 = pnand %p198, %p199
      %p201 = pneg %p200
      // Predicated region
      $region66: #{discriminator_forward.4} parent=5 // pred_check
        _
      $region67: #{discriminator_forward.4} parent=5 // pred_check_branch
        %203 = sbr.rel (%p200) target = $region69
      $region68: #{discriminator_forward.4} parent=5 // pred_region
        %s204 = ssub.s32 %s9, 1
        %s205 = sand.u32 %s43, 1
        %s206 = sand.u32 %s43, 1
        %s207 = smul.addr %s206, 24
        %s208 = scalar_lea.vmem [#allocation2], %s207
        // Predicated region
        $region70: #{discriminator_forward.4} parent=68 // pred_check
          %p209 = pneg %p56
        $region71: #{discriminator_forward.4} parent=68 // pred_check_branch
          %211 = sbr.rel (%p209) target = $region73
        $region72: #{discriminator_forward.4} parent=68 // pred_region
          _
        $region73: #{discriminator_forward.4} parent=68 // pred_fallthru
          _
        %p212 = pneg %p30
        %p213 = pneg %p27
        %s214 = sand.u32 %s43, 1
        %s215 = sand.u32 %s43, 1
        %s216 = smul.addr %s215, 24
        %s217 = scalar_lea.vmem [#allocation2], %s216
        %p218 = pneg %p56
        %p219 = pneg %p53
        %p220 = pneg %p77
        %p221 = pneg %p74
        %p222 = pneg %p103
        %p223 = pneg %p100
        %p224 = scmp.lt.s32.totalorder %s14, 3
        %s225 = scalar_select %p224, %s14, 3
        %s226 = smul.addr %s225, 8
        %s227 = scalar_lea.vmem %s3, %s226
        %p228 = scmp.lt.s32.totalorder %s14, 3
        %s229 = scalar_select %p228, %s14, 3
        %s230 = smul.addr %s229, 8
        %s231 = scalar_lea.vmem %s3, %s230
        %v233 = vld [vmem:[%s0] sm:$0xf]
        %v234 = vld [vmem:[%s208] sm:$0xf]
        %v235 = vld [vmem:[%s208 + $0x4] sm:$0xf]
        %v236 = vld [vmem:[%s208 + $0x8] sm:$0xf]
        %v237 = vld [vmem:[%s208 + $0xc] sm:$0xf]
        %v238 = vld [vmem:[%s208 + $0x10] sm:$0xf]
        %v239 = vld [vmem:[%s208 + $0x14] sm:$0xf]
        %v240 = vld [vmem:[%s2] sm:$0xff]
        %242 = vset.pattern.permute.xlu0 0
        %243 = vperm.xlu0 %242, %v240
        %v244 = vpop.permute.xlu0 %243
        %v252 = vunpack.c.l.b16 %v234
        %v253 = vunpack.c.l.b16 %v235
        %v254 = vunpack.c.l.b16 %v236
        %v255 = vunpack.c.l.b16 %v237
        %v256 = vunpack.c.l.b16 %v238
        %v257 = vunpack.c.l.b16 %v239
        %v258 = vpack.c.b16 %v253, %v252
        %v259 = vpack.c.b16 %v255, %v254
        %v260 = vpack.c.b16 %v257, %v256
        %vm264 = vcmask 392192
        %v266 = vsel %vm264, %v233, 0
        %268 = vmatprep.subr.bf16.mxu0 0
        %269 = vmatpush1.bf16.msra.mxu0 0
        %270 = vmatprep.subr.bf16.mxu0 0
        %271 = vmatpush1.bf16.msra.mxu0 0
        %272 = vmatprep.subr.bf16.mxu0 0
        %273 = vmatpush1.bf16.msra.mxu0 0
        %274 = vmatprep.subr.bf16.mxu0 0
        %275 = vmatpush1.bf16.msra.mxu0 0
        %276 = vmatprep.subr.bf16.mxu0 0
        %277 = vmatpush1.bf16.msra.mxu0 0
        %278 = vmatprep.subr.bf16.mxu0 0
        %279 = vmatpush1.bf16.msra.mxu0 %v260
        %280 = vmatprep.subr.bf16.mxu0 0
        %281 = vmatpush1.bf16.msra.mxu0 %v259
        %282 = vmatprep.subr.bf16.mxu0 0
        %283 = vmatpush1.bf16.msra.mxu0 %v258
        %284 = vmatprep.subr.bf16.mxu0 0
        %285 = vmatpush2.bf16.msra.mxu0 0
        %286 = vmatprep.subr.bf16.mxu0 0
        %287 = vmatpush2.bf16.msra.mxu0 0
        %288 = vmatprep.subr.bf16.mxu0 0
        %289 = vmatpush2.bf16.msra.mxu0 0
        %290 = vmatprep.subr.bf16.mxu0 0
        %291 = vmatpush2.bf16.msra.mxu0 0
        %292 = vmatprep.subr.bf16.mxu0 0
        %293 = vmatpush2.bf16.msra.mxu0 0
        %294 = vmatprep.subr.bf16.mxu0 0
        %295 = vmatpush2.bf16.msra.mxu0 0
        %296 = vmatprep.subr.bf16.mxu0 0
        %297 = vmatpush2.bf16.msra.mxu0 0
        %298 = vmatprep.subr.bf16.mxu0 0
        %299 = vmatpush2.bf16.msra.mxu0 0
        %300 = vmatprep.mubr.bf16.mxu0 0
        %301 = vmatmul.mubr.bf16.gmra.mxu0 %v266
        %v302 = vpop.f32.mrf.mxu0
        %v303 = vadd.f32 %v244, %v302
        %v304 = vpop.f32.mrf.mxu0
        %v305 = vpop.f32.mrf.mxu0
        %v306 = vpop.f32.mrf.mxu0
        %307 = vdwg.mxu0
        %vm308 = vcmp.ge.f32.partialorder %v303, 0.0
        %v309 = vmul.f32 %v303, 0.05
        %v310 = vsel %vm308, %v303, %v309
        %311 = vst [vmem:[%s231] sm:$0xff] %v310
        %p312 = scmp.lt.s32.totalorder %s14, 3
        %s313 = scalar_select %p312, %s14, 3
        %s314 = smul.addr %s313, 8
        %s315 = scalar_lea.vmem %s3, %s314
        // Predicated region
        $region74: #{discriminator_forward.4} parent=68 // pred_check
          %p316 = pneg %p100
        $region75: #{discriminator_forward.4} parent=68 // pred_check_branch
          %318 = sbr.rel (%p316) target = $region77
        $region76: #{discriminator_forward.4} parent=68 // pred_region
          _
        $region77: #{discriminator_forward.4} parent=68 // pred_fallthru
          _
      $region69: #{discriminator_forward.4} parent=5 // pred_fallthru
        _
      %p319 = scmp.le.s32.totalorder 2, %s9
      // Predicated region
      $region78: #{discriminator_forward.4} parent=5 // pred_check
        %p320 = pneg %p319
      $region79: #{discriminator_forward.4} parent=5 // pred_check_branch
        %322 = sbr.rel (%p320) target = $region81
      $region80: #{discriminator_forward.4} parent=5 // pred_region
        %s323 = ssub.s32 %s9, 2
        // Predicated region
        $region82: #{discriminator_forward.4} parent=80 // pred_check
          %p324 = pneg %p106
        $region83: #{discriminator_forward.4} parent=80 // pred_check_branch
          %326 = sbr.rel (%p324) target = $region85
        $region84: #{discriminator_forward.4} parent=80 // pred_region
          %p327 = scmp.lt.s32.totalorder %s15, 3
          %s328 = scalar_select %p327, %s15, 3
          %s329 = smul.addr %s328, 8
          %s330 = scalar_lea.vmem %s3, %s329
        $region85: #{discriminator_forward.4} parent=80 // pred_fallthru
          _
      $region81: #{discriminator_forward.4} parent=5 // pred_fallthru
        _
    $region6: #{discriminator_forward.4} parent=1 // loop_footer
      %s13 = sadd.s32 1, %s9
    $region7: #{discriminator_forward.4} parent=1 // loop_footer_branch
      %8 = sbr.rel target = $region3
    $region8: #{discriminator_forward.4} parent=1 // loop_exit
      _

// kernel: discriminator_forward.5
$region0: #{discriminator_forward.5}
  #allocation0 [shape = 'u32[]', space=smem, size = 0x4, offset = 0x4, fixed_abs, tag = 'smem constant byte address 0x4 - core index']
  #allocation1 [shape = 'u32[144,128]{1,0:T(1,128)}', space=vmem, size = 0x12000, scoped, tag = 'internal scratch']
  %s0 = inlined_call_operand.vmem [shape: bf16[16,128], index: 0, kind: input, shape index: {}]
  %s1 = inlined_call_operand.vmem [shape: bf16[128,128], index: 1, kind: input, shape index: {}]
  %s2 = inlined_call_operand.vmem [shape: f32[16,1], index: 2, kind: input, shape index: {}]
  %s3 = inlined_call_operand.vmem [shape: f32[16,128], index: 3, kind: output, shape index: {}]
  %s4 = sld [smem:[#allocation0]]
  $region22: #{discriminator_forward.5} parent=0
    _
  %s6 = ssub.s32 1, %s4
  %s7 = scalar_select 0, %s6, %s4
  // Predicated region
  $region2: #{discriminator_forward.5} parent=0 // pred_check
    _
  $region3: #{discriminator_forward.5} parent=0 // pred_check_branch
    %9 = sbr.rel (0) target = $region5
  $region4: #{discriminator_forward.5} parent=0 // pred_region
    _
  $region5: #{discriminator_forward.5} parent=0 // pred_fallthru
    _
  // Predicated region
  $region6: #{discriminator_forward.5} parent=0 // pred_check
    _
  $region7: #{discriminator_forward.5} parent=0 // pred_check_branch
    %11 = sbr.rel (0) target = $region9
  $region8: #{discriminator_forward.5} parent=0 // pred_region
    _
  $region9: #{discriminator_forward.5} parent=0 // pred_fallthru
    _
  // Predicated region
  $region10: #{discriminator_forward.5} parent=0 // pred_check
    _
  $region11: #{discriminator_forward.5} parent=0 // pred_check_branch
    %13 = sbr.rel (0) target = $region13
  $region12: #{discriminator_forward.5} parent=0 // pred_region
    _
  $region13: #{discriminator_forward.5} parent=0 // pred_fallthru
    _
  %v15 = vld [vmem:[%s0] sm:$0xf]
  %v16 = vld [vmem:[%s0 + $0x4] sm:$0xf]
  %v17 = vld [vmem:[%s1] sm:$0xf]
  %v18 = vld [vmem:[%s1 + $0x4] sm:$0xf]
  %v19 = vld [vmem:[%s1 + $0x8] sm:$0xf]
  %v20 = vld [vmem:[%s1 + $0xc] sm:$0xf]
  %v21 = vld [vmem:[%s1 + $0x10] sm:$0xf]
  %v22 = vld [vmem:[%s1 + $0x14] sm:$0xf]
  %v23 = vld [vmem:[%s1 + $0x18] sm:$0xf]
  %v24 = vld [vmem:[%s1 + $0x1c] sm:$0xf]
  %v25 = vld [vmem:[%s1 + $0x20] sm:$0xf]
  %v26 = vld [vmem:[%s1 + $0x24] sm:$0xf]
  %v27 = vld [vmem:[%s1 + $0x28] sm:$0xf]
  %v28 = vld [vmem:[%s1 + $0x2c] sm:$0xf]
  %v29 = vld [vmem:[%s1 + $0x30] sm:$0xf]
  %v30 = vld [vmem:[%s1 + $0x34] sm:$0xf]
  %v31 = vld [vmem:[%s1 + $0x38] sm:$0xf]
  %v32 = vld [vmem:[%s1 + $0x3c] sm:$0xf]
  %v33 = vld [vmem:[%s2] sm:$0xff]
  %v34 = vld [vmem:[%s2 + $0x8] sm:$0xff]
  %36 = vset.pattern.permute.xlu0 0
  %37 = vperm.xlu0 %36, %v33
  %v38 = vpop.permute.xlu0 %37
  %41 = vset.pattern.permute.xlu0 0
  %42 = vperm.xlu0 %41, %v34
  %v43 = vpop.permute.xlu0 %42
  %v47 = vunpack.c.l.b16 %v15
  %v48 = vunpack.c.l.b16 %v16
  %v49 = vpack.c.b16 %v48, %v47
  %v67 = vunpack.c.l.b16 %v17
  %v68 = vunpack.c.l.b16 %v18
  %v69 = vunpack.c.l.b16 %v19
  %v70 = vunpack.c.l.b16 %v20
  %v71 = vunpack.c.l.b16 %v21
  %v72 = vunpack.c.l.b16 %v22
  %v73 = vunpack.c.l.b16 %v23
  %v74 = vunpack.c.l.b16 %v24
  %v75 = vunpack.c.l.b16 %v25
  %v76 = vunpack.c.l.b16 %v26
  %v77 = vunpack.c.l.b16 %v27
  %v78 = vunpack.c.l.b16 %v28
  %v79 = vunpack.c.l.b16 %v29
  %v80 = vunpack.c.l.b16 %v30
  %v81 = vunpack.c.l.b16 %v31
  %v82 = vunpack.c.l.b16 %v32
  %v83 = vpack.c.b16 %v68, %v67
  %v84 = vpack.c.b16 %v70, %v69
  %v85 = vpack.c.b16 %v72, %v71
  %v86 = vpack.c.b16 %v74, %v73
  %v87 = vpack.c.b16 %v76, %v75
  %v88 = vpack.c.b16 %v78, %v77
  %v89 = vpack.c.b16 %v80, %v79
  %v90 = vpack.c.b16 %v82, %v81
  %99 = vmatprep.subr.bf16.mxu0 0
  %100 = vmatpush1.bf16.msra.mxu0 %v90
  %101 = vmatprep.subr.bf16.mxu0 0
  %102 = vmatpush1.bf16.msra.mxu0 %v89
  %103 = vmatprep.subr.bf16.mxu0 0
  %104 = vmatpush1.bf16.msra.mxu0 %v88
  %105 = vmatprep.subr.bf16.mxu0 0
  %106 = vmatpush1.bf16.msra.mxu0 %v87
  %107 = vmatprep.subr.bf16.mxu0 0
  %108 = vmatpush1.bf16.msra.mxu0 %v86
  %109 = vmatprep.subr.bf16.mxu0 0
  %110 = vmatpush1.bf16.msra.mxu0 %v85
  %111 = vmatprep.subr.bf16.mxu0 0
  %112 = vmatpush1.bf16.msra.mxu0 %v84
  %113 = vmatprep.subr.bf16.mxu0 0
  %114 = vmatpush1.bf16.msra.mxu0 %v83
  %115 = vmatprep.subr.bf16.mxu0 0
  %116 = vmatpush2.bf16.msra.mxu0 0
  %117 = vmatprep.subr.bf16.mxu0 0
  %118 = vmatpush2.bf16.msra.mxu0 0
  %119 = vmatprep.subr.bf16.mxu0 0
  %120 = vmatpush2.bf16.msra.mxu0 0
  %121 = vmatprep.subr.bf16.mxu0 0
  %122 = vmatpush2.bf16.msra.mxu0 0
  %123 = vmatprep.subr.bf16.mxu0 0
  %124 = vmatpush2.bf16.msra.mxu0 0
  %125 = vmatprep.subr.bf16.mxu0 0
  %126 = vmatpush2.bf16.msra.mxu0 0
  %127 = vmatprep.subr.bf16.mxu0 0
  %128 = vmatpush2.bf16.msra.mxu0 0
  %129 = vmatprep.subr.bf16.mxu0 0
  %130 = vmatpush2.bf16.msra.mxu0 0
  %131 = vmatprep.mubr.bf16.mxu0 0
  %132 = vmatmul.mubr.bf16.gmra.mxu0 %v49
  %v133 = vpop.f32.mrf.mxu0
  %v134 = vadd.f32 %v38, %v133
  %v135 = vpop.f32.mrf.mxu0
  %v136 = vpop.f32.mrf.mxu0
  %v137 = vadd.f32 %v43, %v136
  %v138 = vpop.f32.mrf.mxu0
  %139 = vdwg.mxu0
  %vm140 = vcmp.ge.f32.partialorder %v134, 0.0
  %vm141 = vcmp.ge.f32.partialorder %v137, 0.0
  %v142 = vmul.f32 %v134, 0.05
  %v143 = vmul.f32 %v137, 0.05
  %v144 = vsel %vm140, %v134, %v142
  %v145 = vsel %vm141, %v137, %v143
  %146 = vst [vmem:[%s3] sm:$0xff] %v144
  %147 = vst [vmem:[%s3 + $0x8] sm:$0xff] %v145
  // Predicated region
  $region14: #{discriminator_forward.5} parent=0 // pred_check
    _
  $region15: #{discriminator_forward.5} parent=0 // pred_check_branch
    %149 = sbr.rel (0) target = $region17
  $region16: #{discriminator_forward.5} parent=0 // pred_region
    _
  $region17: #{discriminator_forward.5} parent=0 // pred_fallthru
    _
  // Predicated region
  $region18: #{discriminator_forward.5} parent=0 // pred_check
    _
  $region19: #{discriminator_forward.5} parent=0 // pred_check_branch
    %151 = sbr.rel (0) target = $region21
  $region20: #{discriminator_forward.5} parent=0 // pred_region
    _
  $region21: #{discriminator_forward.5} parent=0 // pred_fallthru
    _

// kernel: discriminator_forward.6
$region0: #{discriminator_forward.6}
  #allocation0 [shape = 'u32[]', space=smem, size = 0x4, offset = 0x4, fixed_abs, tag = 'smem constant byte address 0x4 - core index']
  #allocation1 [shape = 'u32[144,128]{1,0:T(1,128)}', space=vmem, size = 0x12000, scoped, tag = 'internal scratch']
  %s0 = inlined_call_operand.vmem [shape: bf16[32,256], index: 0, kind: input, shape index: {}]
  %s1 = inlined_call_operand.vmem [shape: bf16[256,32], index: 1, kind: input, shape index: {}]
  %s2 = inlined_call_operand.vmem [shape: f32[32,1], index: 2, kind: input, shape index: {}]
  %s3 = inlined_call_operand.vmem [shape: f32[32,32], index: 3, kind: output, shape index: {}]
  %s4 = sld [smem:[#allocation0]]
  $region22: #{discriminator_forward.6} parent=0
    _
  %s6 = ssub.s32 1, %s4
  %s7 = scalar_select 0, %s6, %s4
  // Predicated region
  $region2: #{discriminator_forward.6} parent=0 // pred_check
    _
  $region3: #{discriminator_forward.6} parent=0 // pred_check_branch
    %9 = sbr.rel (0) target = $region5
  $region4: #{discriminator_forward.6} parent=0 // pred_region
    _
  $region5: #{discriminator_forward.6} parent=0 // pred_fallthru
    _
  // Predicated region
  $region6: #{discriminator_forward.6} parent=0 // pred_check
    _
  $region7: #{discriminator_forward.6} parent=0 // pred_check_branch
    %11 = sbr.rel (0) target = $region9
  $region8: #{discriminator_forward.6} parent=0 // pred_region
    _
  $region9: #{discriminator_forward.6} parent=0 // pred_fallthru
    _
  // Predicated region
  $region10: #{discriminator_forward.6} parent=0 // pred_check
    _
  $region11: #{discriminator_forward.6} parent=0 // pred_check_branch
    %13 = sbr.rel (0) target = $region13
  $region12: #{discriminator_forward.6} parent=0 // pred_region
    _
  $region13: #{discriminator_forward.6} parent=0 // pred_fallthru
    _
  %v15 = vld [vmem:[%s0] sm:$0xff]
  %v16 = vld [vmem:[%s0 + $0x8] sm:$0xff]
  %v17 = vld [vmem:[%s0 + $0x10] sm:$0xff]
  %v18 = vld [vmem:[%s0 + $0x18] sm:$0xff]
  %v19 = vld [vmem:[%s1] sm:$0xf]
  %v20 = vld [vmem:[%s1 + $0x4] sm:$0xf]
  %v21 = vld [vmem:[%s1 + $0x8] sm:$0xf]
  %v22 = vld [vmem:[%s1 + $0xc] sm:$0xf]
  %v23 = vld [vmem:[%s1 + $0x10] sm:$0xf]
  %v24 = vld [vmem:[%s1 + $0x14] sm:$0xf]
  %v25 = vld [vmem:[%s1 + $0x18] sm:$0xf]
  %v26 = vld [vmem:[%s1 + $0x1c] sm:$0xf]
  %v27 = vld [vmem:[%s1 + $0x20] sm:$0xf]
  %v28 = vld [vmem:[%s1 + $0x24] sm:$0xf]
  %v29 = vld [vmem:[%s1 + $0x28] sm:$0xf]
  %v30 = vld [vmem:[%s1 + $0x2c] sm:$0xf]
  %v31 = vld [vmem:[%s1 + $0x30] sm:$0xf]
  %v32 = vld [vmem:[%s1 + $0x34] sm:$0xf]
  %v33 = vld [vmem:[%s1 + $0x38] sm:$0xf]
  %v34 = vld [vmem:[%s1 + $0x3c] sm:$0xf]
  %v35 = vld [vmem:[%s1 + $0x40] sm:$0xf]
  %v36 = vld [vmem:[%s1 + $0x44] sm:$0xf]
  %v37 = vld [vmem:[%s1 + $0x48] sm:$0xf]
  %v38 = vld [vmem:[%s1 + $0x4c] sm:$0xf]
  %v39 = vld [vmem:[%s1 + $0x50] sm:$0xf]
  %v40 = vld [vmem:[%s1 + $0x54] sm:$0xf]
  %v41 = vld [vmem:[%s1 + $0x58] sm:$0xf]
  %v42 = vld [vmem:[%s1 + $0x5c] sm:$0xf]
  %v43 = vld [vmem:[%s1 + $0x60] sm:$0xf]
  %v44 = vld [vmem:[%s1 + $0x64] sm:$0xf]
  %v45 = vld [vmem:[%s1 + $0x68] sm:$0xf]
  %v46 = vld [vmem:[%s1 + $0x6c] sm:$0xf]
  %v47 = vld [vmem:[%s1 + $0x70] sm:$0xf]
  %v48 = vld [vmem:[%s1 + $0x74] sm:$0xf]
  %v49 = vld [vmem:[%s1 + $0x78] sm:$0xf]
  %v50 = vld [vmem:[%s1 + $0x7c] sm:$0xf]
  %v51 = vld [vmem:[%s2] sm:$0xff]
  %v52 = vld [vmem:[%s2 + $0x8] sm:$0xff]
  %v53 = vld [vmem:[%s2 + $0x10] sm:$0xff]
  %v54 = vld [vmem:[%s2 + $0x18] sm:$0xff]
  %56 = vset.pattern.permute.xlu0 0
  %57 = vperm.xlu0 %56, %v51
  %v58 = vpop.permute.xlu0 %57
  %61 = vset.pattern.permute.xlu0 0
  %62 = vperm.xlu0 %61, %v52
  %v63 = vpop.permute.xlu0 %62
  %66 = vset.pattern.permute.xlu0 0
  %67 = vperm.xlu0 %66, %v53
  %v68 = vpop.permute.xlu0 %67
  %71 = vset.pattern.permute.xlu0 0
  %72 = vperm.xlu0 %71, %v54
  %v73 = vpop.permute.xlu0 %72
  %v79 = vunpack.c.l.b16 %v15
  %v80 = vunpack.c.h.b16 %v15
  %v81 = vunpack.c.l.b16 %v16
  %v82 = vunpack.c.h.b16 %v16
  %v83 = vunpack.c.l.b16 %v17
  %v84 = vunpack.c.h.b16 %v17
  %v85 = vunpack.c.l.b16 %v18
  %v86 = vunpack.c.h.b16 %v18
  %v87 = vpack.c.b16 %v81, %v79
  %v88 = vpack.c.b16 %v82, %v80
  %v89 = vpack.c.b16 %v85, %v83
  %v90 = vpack.c.b16 %v86, %v84
  %v127 = vunpack.c.l.b16 %v19
  %v128 = vunpack.c.l.b16 %v20
  %v129 = vunpack.c.l.b16 %v21
  %v130 = vunpack.c.l.b16 %v22
  %v131 = vunpack.c.l.b16 %v23
  %v132 = vunpack.c.l.b16 %v24
  %v133 = vunpack.c.l.b16 %v25
  %v134 = vunpack.c.l.b16 %v26
  %v135 = vunpack.c.l.b16 %v27
  %v136 = vunpack.c.l.b16 %v28
  %v137 = vunpack.c.l.b16 %v29
  %v138 = vunpack.c.l.b16 %v30
  %v139 = vunpack.c.l.b16 %v31
  %v140 = vunpack.c.l.b16 %v32
  %v141 = vunpack.c.l.b16 %v33
  %v142 = vunpack.c.l.b16 %v34
  %v143 = vunpack.c.l.b16 %v35
  %v144 = vunpack.c.l.b16 %v36
  %v145 = vunpack.c.l.b16 %v37
  %v146 = vunpack.c.l.b16 %v38
  %v147 = vunpack.c.l.b16 %v39
  %v148 = vunpack.c.l.b16 %v40
  %v149 = vunpack.c.l.b16 %v41
  %v150 = vunpack.c.l.b16 %v42
  %v151 = vunpack.c.l.b16 %v43
  %v152 = vunpack.c.l.b16 %v44
  %v153 = vunpack.c.l.b16 %v45
  %v154 = vunpack.c.l.b16 %v46
  %v155 = vunpack.c.l.b16 %v47
  %v156 = vunpack.c.l.b16 %v48
  %v157 = vunpack.c.l.b16 %v49
  %v158 = vunpack.c.l.b16 %v50
  %v159 = vpack.c.b16 %v128, %v127
  %v160 = vpack.c.b16 %v130, %v129
  %v161 = vpack.c.b16 %v132, %v131
  %v162 = vpack.c.b16 %v134, %v133
  %v163 = vpack.c.b16 %v136, %v135
  %v164 = vpack.c.b16 %v138, %v137
  %v165 = vpack.c.b16 %v140, %v139
  %v166 = vpack.c.b16 %v142, %v141
  %v167 = vpack.c.b16 %v144, %v143
  %v168 = vpack.c.b16 %v146, %v145
  %v169 = vpack.c.b16 %v148, %v147
  %v170 = vpack.c.b16 %v150, %v149
  %v171 = vpack.c.b16 %v152, %v151
  %v172 = vpack.c.b16 %v154, %v153
  %v173 = vpack.c.b16 %v156, %v155
  %v174 = vpack.c.b16 %v158, %v157
  %191 = vmatprep.subr.bf16.mxu0 0
  %192 = vmatpush1.bf16.msra.mxu0 %v166
  %193 = vmatprep.subr.bf16.mxu0 0
  %194 = vmatpush1.bf16.msra.mxu0 %v165
  %195 = vmatprep.subr.bf16.mxu0 0
  %196 = vmatpush1.bf16.msra.mxu0 %v164
  %197 = vmatprep.subr.bf16.mxu0 0
  %198 = vmatpush1.bf16.msra.mxu0 %v163
  %199 = vmatprep.subr.bf16.mxu0 0
  %200 = vmatpush1.bf16.msra.mxu0 %v162
  %201 = vmatprep.subr.bf16.mxu0 0
  %202 = vmatpush1.bf16.msra.mxu0 %v161
  %203 = vmatprep.subr.bf16.mxu0 0
  %204 = vmatpush1.bf16.msra.mxu0 %v160
  %205 = vmatprep.subr.bf16.mxu0 0
  %206 = vmatpush1.bf16.msra.mxu0 %v159
  %207 = vmatprep.subr.bf16.mxu0 0
  %208 = vmatpush2.bf16.msra.mxu0 %v174
  %209 = vmatprep.subr.bf16.mxu0 0
  %210 = vmatpush2.bf16.msra.mxu0 %v173
  %211 = vmatprep.subr.bf16.mxu0 0
  %212 = vmatpush2.bf16.msra.mxu0 %v172
  %213 = vmatprep.subr.bf16.mxu0 0
  %214 = vmatpush2.bf16.msra.mxu0 %v171
  %215 = vmatprep.subr.bf16.mxu0 0
  %216 = vmatpush2.bf16.msra.mxu0 %v170
  %217 = vmatprep.subr.bf16.mxu0 0
  %218 = vmatpush2.bf16.msra.mxu0 %v169
  %219 = vmatprep.subr.bf16.mxu0 0
  %220 = vmatpush2.bf16.msra.mxu0 %v168
  %221 = vmatprep.subr.bf16.mxu0 0
  %222 = vmatpush2.bf16.msra.mxu0 %v167
  %223 = vmatprep.mubr.bf16.mxu0 %v88
  %224 = vmatmul.mubr.bf16.gmra.mxu0 %v87
  %v225 = vpop.f32.mrf.mxu0
  %v226 = vadd.f32 %v58, %v225
  %v227 = vpop.f32.mrf.mxu0
  %v228 = vpop.f32.mrf.mxu0
  %v229 = vadd.f32 %v63, %v228
  %v230 = vpop.f32.mrf.mxu0
  %231 = vmatprep.mubr.bf16.mxu0 %v90
  %232 = vmatmul.mubr.bf16.gmra.mxu0 %v89
  %v233 = vpop.f32.mrf.mxu0
  %v234 = vadd.f32 %v68, %v233
  %v235 = vpop.f32.mrf.mxu0
  %v236 = vpop.f32.mrf.mxu0
  %v237 = vadd.f32 %v73, %v236
  %v238 = vpop.f32.mrf.mxu0
  %239 = vdwg.mxu0
  %vm240 = vcmp.ge.f32.partialorder %v226, 0.0
  %vm241 = vcmp.ge.f32.partialorder %v229, 0.0
  %vm242 = vcmp.ge.f32.partialorder %v234, 0.0
  %vm243 = vcmp.ge.f32.partialorder %v237, 0.0
  %v244 = vmul.f32 %v226, 0.05
  %v245 = vmul.f32 %v229, 0.05
  %v246 = vmul.f32 %v234, 0.05
  %v247 = vmul.f32 %v237, 0.05
  %v248 = vsel %vm240, %v226, %v244
  %v249 = vsel %vm241, %v229, %v245
  %v250 = vsel %vm242, %v234, %v246
  %v251 = vsel %vm243, %v237, %v247
  %vm252 = vcmask 261120
  %253 = vst.msk [vmem:[%s3] sm:$0xff] %vm252, %v248
  %254 = vst.msk [vmem:[%s3 + $0x8] sm:$0xff] %vm252, %v249
  %255 = vst.msk [vmem:[%s3 + $0x10] sm:$0xff] %vm252, %v250
  %256 = vst.msk [vmem:[%s3 + $0x18] sm:$0xff] %vm252, %v251
  // Predicated region
  $region14: #{discriminator_forward.6} parent=0 // pred_check
    _
  $region15: #{discriminator_forward.6} parent=0 // pred_check_branch
    %258 = sbr.rel (0) target = $region17
  $region16: #{discriminator_forward.6} parent=0 // pred_region
    _
  $region17: #{discriminator_forward.6} parent=0 // pred_fallthru
    _
  // Predicated region
  $region18: #{discriminator_forward.6} parent=0 // pred_check
    _
  $region19: #{discriminator_forward.6} parent=0 // pred_check_branch
    %260 = sbr.rel (0) target = $region21
  $region20: #{discriminator_forward.6} parent=0 // pred_region
    _
  $region21: #{discriminator_forward.6} parent=0 // pred_fallthru
    _

// kernel: discriminator_forward.7
$region0: #{discriminator_forward.7}
  #allocation0 [shape = 'u32[]', space=smem, size = 0x4, offset = 0x4, fixed_abs, tag = 'smem constant byte address 0x4 - core index']
  #allocation1 [shape = 'u32[144,128]{1,0:T(1,128)}', space=vmem, size = 0x12000, scoped, tag = 'internal scratch']
  %s0 = inlined_call_operand.vmem [shape: bf16[64,512], index: 0, kind: input, shape index: {}]
  %s1 = inlined_call_operand.vmem [shape: bf16[512,8], index: 1, kind: input, shape index: {}]
  %s2 = inlined_call_operand.vmem [shape: f32[64,1], index: 2, kind: input, shape index: {}]
  %s3 = inlined_call_operand.vmem [shape: f32[64,8], index: 3, kind: output, shape index: {}]
  %s4 = sld [smem:[#allocation0]]
  $region22: #{discriminator_forward.7} parent=0
    _
  %s6 = ssub.s32 1, %s4
  %s7 = scalar_select 0, %s6, %s4
  // Predicated region
  $region2: #{discriminator_forward.7} parent=0 // pred_check
    _
  $region3: #{discriminator_forward.7} parent=0 // pred_check_branch
    %9 = sbr.rel (0) target = $region5
  $region4: #{discriminator_forward.7} parent=0 // pred_region
    _
  $region5: #{discriminator_forward.7} parent=0 // pred_fallthru
    _
  // Predicated region
  $region6: #{discriminator_forward.7} parent=0 // pred_check
    _
  $region7: #{discriminator_forward.7} parent=0 // pred_check_branch
    %11 = sbr.rel (0) target = $region9
  $region8: #{discriminator_forward.7} parent=0 // pred_region
    _
  $region9: #{discriminator_forward.7} parent=0 // pred_fallthru
    _
  // Predicated region
  $region10: #{discriminator_forward.7} parent=0 // pred_check
    _
  $region11: #{discriminator_forward.7} parent=0 // pred_check_branch
    %13 = sbr.rel (0) target = $region13
  $region12: #{discriminator_forward.7} parent=0 // pred_region
    _
  $region13: #{discriminator_forward.7} parent=0 // pred_fallthru
    _
  %v15 = vld [vmem:[%s0] sm:$0xff]
  %v16 = vld [vmem:[%s0 + $0x8] sm:$0xff]
  %v17 = vld [vmem:[%s0 + $0x10] sm:$0xff]
  %v18 = vld [vmem:[%s0 + $0x18] sm:$0xff]
  %v19 = vld [vmem:[%s0 + $0x20] sm:$0xff]
  %v20 = vld [vmem:[%s0 + $0x28] sm:$0xff]
  %v21 = vld [vmem:[%s0 + $0x30] sm:$0xff]
  %v22 = vld [vmem:[%s0 + $0x38] sm:$0xff]
  %v23 = vld [vmem:[%s0 + $0x40] sm:$0xff]
  %v24 = vld [vmem:[%s0 + $0x48] sm:$0xff]
  %v25 = vld [vmem:[%s0 + $0x50] sm:$0xff]
  %v26 = vld [vmem:[%s0 + $0x58] sm:$0xff]
  %v27 = vld [vmem:[%s0 + $0x60] sm:$0xff]
  %v28 = vld [vmem:[%s0 + $0x68] sm:$0xff]
  %v29 = vld [vmem:[%s0 + $0x70] sm:$0xff]
  %v30 = vld [vmem:[%s0 + $0x78] sm:$0xff]
  %v31 = vld [vmem:[%s1] sm:$0xf]
  %v32 = vld [vmem:[%s1 + $0x4] sm:$0xf]
  %v33 = vld [vmem:[%s1 + $0x8] sm:$0xf]
  %v34 = vld [vmem:[%s1 + $0xc] sm:$0xf]
  %v35 = vld [vmem:[%s1 + $0x10] sm:$0xf]
  %v36 = vld [vmem:[%s1 + $0x14] sm:$0xf]
  %v37 = vld [vmem:[%s1 + $0x18] sm:$0xf]
  %v38 = vld [vmem:[%s1 + $0x1c] sm:$0xf]
  %v39 = vld [vmem:[%s1 + $0x20] sm:$0xf]
  %v40 = vld [vmem:[%s1 + $0x24] sm:$0xf]
  %v41 = vld [vmem:[%s1 + $0x28] sm:$0xf]
  %v42 = vld [vmem:[%s1 + $0x2c] sm:$0xf]
  %v43 = vld [vmem:[%s1 + $0x30] sm:$0xf]
  %v44 = vld [vmem:[%s1 + $0x34] sm:$0xf]
  %v45 = vld [vmem:[%s1 + $0x38] sm:$0xf]
  %v46 = vld [vmem:[%s1 + $0x3c] sm:$0xf]
  %v47 = vld [vmem:[%s1 + $0x40] sm:$0xf]
  %v48 = vld [vmem:[%s1 + $0x44] sm:$0xf]
  %v49 = vld [vmem:[%s1 + $0x48] sm:$0xf]
  %v50 = vld [vmem:[%s1 + $0x4c] sm:$0xf]
  %v51 = vld [vmem:[%s1 + $0x50] sm:$0xf]
  %v52 = vld [vmem:[%s1 + $0x54] sm:$0xf]
  %v53 = vld [vmem:[%s1 + $0x58] sm:$0xf]
  %v54 = vld [vmem:[%s1 + $0x5c] sm:$0xf]
  %v55 = vld [vmem:[%s1 + $0x60] sm:$0xf]
  %v56 = vld [vmem:[%s1 + $0x64] sm:$0xf]
  %v57 = vld [vmem:[%s1 + $0x68] sm:$0xf]
  %v58 = vld [vmem:[%s1 + $0x6c] sm:$0xf]
  %v59 = vld [vmem:[%s1 + $0x70] sm:$0xf]
  %v60 = vld [vmem:[%s1 + $0x74] sm:$0xf]
  %v61 = vld [vmem:[%s1 + $0x78] sm:$0xf]
  %v62 = vld [vmem:[%s1 + $0x7c] sm:$0xf]
  %v63 = vld [vmem:[%s1 + $0x80] sm:$0xf]
  %v64 = vld [vmem:[%s1 + $0x84] sm:$0xf]
  %v65 = vld [vmem:[%s1 + $0x88] sm:$0xf]
  %v66 = vld [vmem:[%s1 + $0x8c] sm:$0xf]
  %v67 = vld [vmem:[%s1 + $0x90] sm:$0xf]
  %v68 = vld [vmem:[%s1 + $0x94] sm:$0xf]
  %v69 = vld [vmem:[%s1 + $0x98] sm:$0xf]
  %v70 = vld [vmem:[%s1 + $0x9c] sm:$0xf]
  %v71 = vld [vmem:[%s1 + $0xa0] sm:$0xf]
  %v72 = vld [vmem:[%s1 + $0xa4] sm:$0xf]
  %v73 = vld [vmem:[%s1 + $0xa8] sm:$0xf]
  %v74 = vld [vmem:[%s1 + $0xac] sm:$0xf]
  %v75 = vld [vmem:[%s1 + $0xb0] sm:$0xf]
  %v76 = vld [vmem:[%s1 + $0xb4] sm:$0xf]
  %v77 = vld [vmem:[%s1 + $0xb8] sm:$0xf]
  %v78 = vld [vmem:[%s1 + $0xbc] sm:$0xf]
  %v79 = vld [vmem:[%s1 + $0xc0] sm:$0xf]
  %v80 = vld [vmem:[%s1 + $0xc4] sm:$0xf]
  %v81 = vld [vmem:[%s1 + $0xc8] sm:$0xf]
  %v82 = vld [vmem:[%s1 + $0xcc] sm:$0xf]
  %v83 = vld [vmem:[%s1 + $0xd0] sm:$0xf]
  %v84 = vld [vmem:[%s1 + $0xd4] sm:$0xf]
  %v85 = vld [vmem:[%s1 + $0xd8] sm:$0xf]
  %v86 = vld [vmem:[%s1 + $0xdc] sm:$0xf]
  %v87 = vld [vmem:[%s1 + $0xe0] sm:$0xf]
  %v88 = vld [vmem:[%s1 + $0xe4] sm:$0xf]
  %v89 = vld [vmem:[%s1 + $0xe8] sm:$0xf]
  %v90 = vld [vmem:[%s1 + $0xec] sm:$0xf]
  %v91 = vld [vmem:[%s1 + $0xf0] sm:$0xf]
  %v92 = vld [vmem:[%s1 + $0xf4] sm:$0xf]
  %v93 = vld [vmem:[%s1 + $0xf8] sm:$0xf]
  %v94 = vld [vmem:[%s1 + $0xfc] sm:$0xf]
  %v95 = vld [vmem:[%s2] sm:$0xff]
  %v96 = vld [vmem:[%s2 + $0x8] sm:$0xff]
  %v97 = vld [vmem:[%s2 + $0x10] sm:$0xff]
  %v98 = vld [vmem:[%s2 + $0x18] sm:$0xff]
  %v99 = vld [vmem:[%s2 + $0x20] sm:$0xff]
  %v100 = vld [vmem:[%s2 + $0x28] sm:$0xff]
  %v101 = vld [vmem:[%s2 + $0x30] sm:$0xff]
  %v102 = vld [vmem:[%s2 + $0x38] sm:$0xff]
  %104 = vset.pattern.permute.xlu0 0
  %105 = vperm.xlu0 %104, %v95
  %v106 = vpop.permute.xlu0 %105
  %109 = vset.pattern.permute.xlu0 0
  %110 = vperm.xlu0 %109, %v96
  %v111 = vpop.permute.xlu0 %110
  %114 = vset.pattern.permute.xlu0 0
  %115 = vperm.xlu0 %114, %v97
  %v116 = vpop.permute.xlu0 %115
  %119 = vset.pattern.permute.xlu0 0
  %120 = vperm.xlu0 %119, %v98
  %v121 = vpop.permute.xlu0 %120
  %124 = vset.pattern.permute.xlu0 0
  %125 = vperm.xlu0 %124, %v99
  %v126 = vpop.permute.xlu0 %125
  %129 = vset.pattern.permute.xlu0 0
  %130 = vperm.xlu0 %129, %v100
  %v131 = vpop.permute.xlu0 %130
  %134 = vset.pattern.permute.xlu0 0
  %135 = vperm.xlu0 %134, %v101
  %v136 = vpop.permute.xlu0 %135
  %139 = vset.pattern.permute.xlu0 0
  %140 = vperm.xlu0 %139, %v102
  %v141 = vpop.permute.xlu0 %140
  %v159 = vunpack.c.l.b16 %v15
  %v160 = vunpack.c.h.b16 %v15
  %v161 = vunpack.c.l.b16 %v16
  %v162 = vunpack.c.h.b16 %v16
  %v163 = vunpack.c.l.b16 %v17
  %v164 = vunpack.c.h.b16 %v17
  %v165 = vunpack.c.l.b16 %v18
  %v166 = vunpack.c.h.b16 %v18
  %v167 = vunpack.c.l.b16 %v19
  %v168 = vunpack.c.h.b16 %v19
  %v169 = vunpack.c.l.b16 %v20
  %v170 = vunpack.c.h.b16 %v20
  %v171 = vunpack.c.l.b16 %v21
  %v172 = vunpack.c.h.b16 %v21
  %v173 = vunpack.c.l.b16 %v22
  %v174 = vunpack.c.h.b16 %v22
  %v175 = vunpack.c.l.b16 %v23
  %v176 = vunpack.c.h.b16 %v23
  %v177 = vunpack.c.l.b16 %v24
  %v178 = vunpack.c.h.b16 %v24
  %v179 = vunpack.c.l.b16 %v25
  %v180 = vunpack.c.h.b16 %v25
  %v181 = vunpack.c.l.b16 %v26
  %v182 = vunpack.c.h.b16 %v26
  %v183 = vunpack.c.l.b16 %v27
  %v184 = vunpack.c.h.b16 %v27
  %v185 = vunpack.c.l.b16 %v28
  %v186 = vunpack.c.h.b16 %v28
  %v187 = vunpack.c.l.b16 %v29
  %v188 = vunpack.c.h.b16 %v29
  %v189 = vunpack.c.l.b16 %v30
  %v190 = vunpack.c.h.b16 %v30
  %v191 = vpack.c.b16 %v163, %v159
  %v192 = vpack.c.b16 %v164, %v160
  %v193 = vpack.c.b16 %v165, %v161
  %v194 = vpack.c.b16 %v166, %v162
  %v195 = vpack.c.b16 %v171, %v167
  %v196 = vpack.c.b16 %v172, %v168
  %v197 = vpack.c.b16 %v173, %v169
  %v198 = vpack.c.b16 %v174, %v170
  %v199 = vpack.c.b16 %v179, %v175
  %v200 = vpack.c.b16 %v180, %v176
  %v201 = vpack.c.b16 %v181, %v177
  %v202 = vpack.c.b16 %v182, %v178
  %v203 = vpack.c.b16 %v187, %v183
  %v204 = vpack.c.b16 %v188, %v184
  %v205 = vpack.c.b16 %v189, %v185
  %v206 = vpack.c.b16 %v190, %v186
  %v287 = vunpack.c.l.b16 %v31
  %v288 = vunpack.c.l.b16 %v32
  %v289 = vunpack.c.l.b16 %v33
  %v290 = vunpack.c.l.b16 %v34
  %v291 = vunpack.c.l.b16 %v35
  %v292 = vunpack.c.l.b16 %v36
  %v293 = vunpack.c.l.b16 %v37
  %v294 = vunpack.c.l.b16 %v38
  %v295 = vunpack.c.l.b16 %v39
  %v296 = vunpack.c.l.b16 %v40
  %v297 = vunpack.c.l.b16 %v41
  %v298 = vunpack.c.l.b16 %v42
  %v299 = vunpack.c.l.b16 %v43
  %v300 = vunpack.c.l.b16 %v44
  %v301 = vunpack.c.l.b16 %v45
  %v302 = vunpack.c.l.b16 %v46
  %v303 = vunpack.c.l.b16 %v47
  %v304 = vunpack.c.l.b16 %v48
  %v305 = vunpack.c.l.b16 %v49
  %v306 = vunpack.c.l.b16 %v50
  %v307 = vunpack.c.l.b16 %v51
  %v308 = vunpack.c.l.b16 %v52
  %v309 = vunpack.c.l.b16 %v53
  %v310 = vunpack.c.l.b16 %v54
  %v311 = vunpack.c.l.b16 %v55
  %v312 = vunpack.c.l.b16 %v56
  %v313 = vunpack.c.l.b16 %v57
  %v314 = vunpack.c.l.b16 %v58
  %v315 = vunpack.c.l.b16 %v59
  %v316 = vunpack.c.l.b16 %v60
  %v317 = vunpack.c.l.b16 %v61
  %v318 = vunpack.c.l.b16 %v62
  %v319 = vunpack.c.l.b16 %v63
  %v320 = vunpack.c.l.b16 %v64
  %v321 = vunpack.c.l.b16 %v65
  %v322 = vunpack.c.l.b16 %v66
  %v323 = vunpack.c.l.b16 %v67
  %v324 = vunpack.c.l.b16 %v68
  %v325 = vunpack.c.l.b16 %v69
  %v326 = vunpack.c.l.b16 %v70
  %v327 = vunpack.c.l.b16 %v71
  %v328 = vunpack.c.l.b16 %v72
  %v329 = vunpack.c.l.b16 %v73
  %v330 = vunpack.c.l.b16 %v74
  %v331 = vunpack.c.l.b16 %v75
  %v332 = vunpack.c.l.b16 %v76
  %v333 = vunpack.c.l.b16 %v77
  %v334 = vunpack.c.l.b16 %v78
  %v335 = vunpack.c.l.b16 %v79
  %v336 = vunpack.c.l.b16 %v80
  %v337 = vunpack.c.l.b16 %v81
  %v338 = vunpack.c.l.b16 %v82
  %v339 = vunpack.c.l.b16 %v83
  %v340 = vunpack.c.l.b16 %v84
  %v341 = vunpack.c.l.b16 %v85
  %v342 = vunpack.c.l.b16 %v86
  %v343 = vunpack.c.l.b16 %v87
  %v344 = vunpack.c.l.b16 %v88
  %v345 = vunpack.c.l.b16 %v89
  %v346 = vunpack.c.l.b16 %v90
  %v347 = vunpack.c.l.b16 %v91
  %v348 = vunpack.c.l.b16 %v92
  %v349 = vunpack.c.l.b16 %v93
  %v350 = vunpack.c.l.b16 %v94
  %v351 = vpack.c.b16 %v288, %v287
  %v352 = vpack.c.b16 %v290, %v289
  %v353 = vpack.c.b16 %v292, %v291
  %v354 = vpack.c.b16 %v294, %v293
  %v355 = vpack.c.b16 %v296, %v295
  %v356 = vpack.c.b16 %v298, %v297
  %v357 = vpack.c.b16 %v300, %v299
  %v358 = vpack.c.b16 %v302, %v301
  %v359 = vpack.c.b16 %v304, %v303
  %v360 = vpack.c.b16 %v306, %v305
  %v361 = vpack.c.b16 %v308, %v307
  %v362 = vpack.c.b16 %v310, %v309
  %v363 = vpack.c.b16 %v312, %v311
  %v364 = vpack.c.b16 %v314, %v313
  %v365 = vpack.c.b16 %v316, %v315
  %v366 = vpack.c.b16 %v318, %v317
  %v367 = vpack.c.b16 %v320, %v319
  %v368 = vpack.c.b16 %v322, %v321
  %v369 = vpack.c.b16 %v324, %v323
  %v370 = vpack.c.b16 %v326, %v325
  %v371 = vpack.c.b16 %v328, %v327
  %v372 = vpack.c.b16 %v330, %v329
  %v373 = vpack.c.b16 %v332, %v331
  %v374 = vpack.c.b16 %v334, %v333
  %v375 = vpack.c.b16 %v336, %v335
  %v376 = vpack.c.b16 %v338, %v337
  %v377 = vpack.c.b16 %v340, %v339
  %v378 = vpack.c.b16 %v342, %v341
  %v379 = vpack.c.b16 %v344, %v343
  %v380 = vpack.c.b16 %v346, %v345
  %v381 = vpack.c.b16 %v348, %v347
  %v382 = vpack.c.b16 %v350, %v349
  %415 = vmatprep.subr.bf16.mxu0 0
  %416 = vmatpush1.bf16.msra.mxu0 %v358
  %417 = vmatprep.subr.bf16.mxu0 0
  %418 = vmatpush1.bf16.msra.mxu0 %v357
  %419 = vmatprep.subr.bf16.mxu0 0
  %420 = vmatpush1.bf16.msra.mxu0 %v356
  %421 = vmatprep.subr.bf16.mxu0 0
  %422 = vmatpush1.bf16.msra.mxu0 %v355
  %423 = vmatprep.subr.bf16.mxu0 0
  %424 = vmatpush1.bf16.msra.mxu0 %v354
  %425 = vmatprep.subr.bf16.mxu0 0
  %426 = vmatpush1.bf16.msra.mxu0 %v353
  %427 = vmatprep.subr.bf16.mxu0 0
  %428 = vmatpush1.bf16.msra.mxu0 %v352
  %429 = vmatprep.subr.bf16.mxu0 0
  %430 = vmatpush1.bf16.msra.mxu0 %v351
  %431 = vmatprep.subr.bf16.mxu0 0
  %432 = vmatpush2.bf16.msra.mxu0 %v366
  %433 = vmatprep.subr.bf16.mxu0 0
  %434 = vmatpush2.bf16.msra.mxu0 %v365
  %435 = vmatprep.subr.bf16.mxu0 0
  %436 = vmatpush2.bf16.msra.mxu0 %v364
  %437 = vmatprep.subr.bf16.mxu0 0
  %438 = vmatpush2.bf16.msra.mxu0 %v363
  %439 = vmatprep.subr.bf16.mxu0 0
  %440 = vmatpush2.bf16.msra.mxu0 %v362
  %441 = vmatprep.subr.bf16.mxu0 0
  %442 = vmatpush2.bf16.msra.mxu0 %v361
  %443 = vmatprep.subr.bf16.mxu0 0
  %444 = vmatpush2.bf16.msra.mxu0 %v360
  %445 = vmatprep.subr.bf16.mxu0 0
  %446 = vmatpush2.bf16.msra.mxu0 %v359
  %447 = vmatprep.mubr.bf16.mxu0 %v192
  %448 = vmatmul.mubr.bf16.gmra.mxu0 %v191
  %v449 = vpop.f32.mrf.mxu0
  %v450 = vadd.f32 %v106, %v449
  %v451 = vpop.f32.mrf.mxu0
  %v452 = vpop.f32.mrf.mxu0
  %v453 = vadd.f32 %v111, %v452
  %v454 = vpop.f32.mrf.mxu0
  %455 = vmatprep.mubr.bf16.mxu0 %v196
  %456 = vmatmul.mubr.bf16.gmra.mxu0 %v195
  %v457 = vpop.f32.mrf.mxu0
  %v458 = vadd.f32 %v116, %v457
  %v459 = vpop.f32.mrf.mxu0
  %v460 = vpop.f32.mrf.mxu0
  %v461 = vadd.f32 %v121, %v460
  %v462 = vpop.f32.mrf.mxu0
  %463 = vmatprep.mubr.bf16.mxu0 %v200
  %464 = vmatmul.mubr.bf16.gmra.mxu0 %v199
  %v465 = vpop.f32.mrf.mxu0
  %v466 = vadd.f32 %v126, %v465
  %v467 = vpop.f32.mrf.mxu0
  %v468 = vpop.f32.mrf.mxu0
  %v469 = vadd.f32 %v131, %v468
  %v470 = vpop.f32.mrf.mxu0
  %471 = vmatprep.mubr.bf16.mxu0 %v204
  %472 = vmatmul.mubr.bf16.gmra.mxu0 %v203
  %v473 = vpop.f32.mrf.mxu0
  %v474 = vadd.f32 %v136, %v473
  %v475 = vpop.f32.mrf.mxu0
  %v476 = vpop.f32.mrf.mxu0
  %v477 = vadd.f32 %v141, %v476
  %v478 = vpop.f32.mrf.mxu0
  %479 = vdwg.mxu0
  %480 = vmatprep.subr.bf16.mxu0 0
  %481 = vmatpush1.bf16.msra.mxu0 %v374
  %482 = vmatprep.subr.bf16.mxu0 0
  %483 = vmatpush1.bf16.msra.mxu0 %v373
  %484 = vmatprep.subr.bf16.mxu0 0
  %485 = vmatpush1.bf16.msra.mxu0 %v372
  %486 = vmatprep.subr.bf16.mxu0 0
  %487 = vmatpush1.bf16.msra.mxu0 %v371
  %488 = vmatprep.subr.bf16.mxu0 0
  %489 = vmatpush1.bf16.msra.mxu0 %v370
  %490 = vmatprep.subr.bf16.mxu0 0
  %491 = vmatpush1.bf16.msra.mxu0 %v369
  %492 = vmatprep.subr.bf16.mxu0 0
  %493 = vmatpush1.bf16.msra.mxu0 %v368
  %494 = vmatprep.subr.bf16.mxu0 0
  %495 = vmatpush1.bf16.msra.mxu0 %v367
  %496 = vmatprep.subr.bf16.mxu0 0
  %497 = vmatpush2.bf16.msra.mxu0 %v382
  %498 = vmatprep.subr.bf16.mxu0 0
  %499 = vmatpush2.bf16.msra.mxu0 %v381
  %500 = vmatprep.subr.bf16.mxu0 0
  %501 = vmatpush2.bf16.msra.mxu0 %v380
  %502 = vmatprep.subr.bf16.mxu0 0
  %503 = vmatpush2.bf16.msra.mxu0 %v379
  %504 = vmatprep.subr.bf16.mxu0 0
  %505 = vmatpush2.bf16.msra.mxu0 %v378
  %506 = vmatprep.subr.bf16.mxu0 0
  %507 = vmatpush2.bf16.msra.mxu0 %v377
  %508 = vmatprep.subr.bf16.mxu0 0
  %509 = vmatpush2.bf16.msra.mxu0 %v376
  %510 = vmatprep.subr.bf16.mxu0 0
  %511 = vmatpush2.bf16.msra.mxu0 %v375
  %512 = vmatprep.mubr.bf16.mxu0 %v194
  %513 = vmatmul.mubr.bf16.gmra.mxu0 %v193
  %v514 = vpop.f32.mrf.mxu0
  %v515 = vadd.f32 %v450, %v514
  %v516 = vpop.f32.mrf.mxu0
  %v517 = vpop.f32.mrf.mxu0
  %v518 = vadd.f32 %v453, %v517
  %v519 = vpop.f32.mrf.mxu0
  %520 = vmatprep.mubr.bf16.mxu0 %v198
  %521 = vmatmul.mubr.bf16.gmra.mxu0 %v197
  %v522 = vpop.f32.mrf.mxu0
  %v523 = vadd.f32 %v458, %v522
  %v524 = vpop.f32.mrf.mxu0
  %v525 = vpop.f32.mrf.mxu0
  %v526 = vadd.f32 %v461, %v525
  %v527 = vpop.f32.mrf.mxu0
  %528 = vmatprep.mubr.bf16.mxu0 %v202
  %529 = vmatmul.mubr.bf16.gmra.mxu0 %v201
  %v530 = vpop.f32.mrf.mxu0
  %v531 = vadd.f32 %v466, %v530
  %v532 = vpop.f32.mrf.mxu0
  %v533 = vpop.f32.mrf.mxu0
  %v534 = vadd.f32 %v469, %v533
  %v535 = vpop.f32.mrf.mxu0
  %536 = vmatprep.mubr.bf16.mxu0 %v206
  %537 = vmatmul.mubr.bf16.gmra.mxu0 %v205
  %v538 = vpop.f32.mrf.mxu0
  %v539 = vadd.f32 %v474, %v538
  %v540 = vpop.f32.mrf.mxu0
  %v541 = vpop.f32.mrf.mxu0
  %v542 = vadd.f32 %v477, %v541
  %v543 = vpop.f32.mrf.mxu0
  %544 = vdwg.mxu0
  %vm545 = vcmp.ge.f32.partialorder %v515, 0.0
  %vm546 = vcmp.ge.f32.partialorder %v518, 0.0
  %vm547 = vcmp.ge.f32.partialorder %v523, 0.0
  %vm548 = vcmp.ge.f32.partialorder %v526, 0.0
  %vm549 = vcmp.ge.f32.partialorder %v531, 0.0
  %vm550 = vcmp.ge.f32.partialorder %v534, 0.0
  %vm551 = vcmp.ge.f32.partialorder %v539, 0.0
  %vm552 = vcmp.ge.f32.partialorder %v542, 0.0
  %v553 = vmul.f32 %v515, 0.05
  %v554 = vmul.f32 %v518, 0.05
  %v555 = vmul.f32 %v523, 0.05
  %v556 = vmul.f32 %v526, 0.05
  %v557 = vmul.f32 %v531, 0.05
  %v558 = vmul.f32 %v534, 0.05
  %v559 = vmul.f32 %v539, 0.05
  %v560 = vmul.f32 %v542, 0.05
  %v561 = vsel %vm545, %v515, %v553
  %v562 = vsel %vm546, %v518, %v554
  %v563 = vsel %vm547, %v523, %v555
  %v564 = vsel %vm548, %v526, %v556
  %v565 = vsel %vm549, %v531, %v557
  %v566 = vsel %vm550, %v534, %v558
  %v567 = vsel %vm551, %v539, %v559
  %v568 = vsel %vm552, %v542, %v560
  %vm569 = vcmask 64512
  %570 = vst.msk [vmem:[%s3] sm:$0xff] %vm569, %v561
  %571 = vst.msk [vmem:[%s3 + $0x8] sm:$0xff] %vm569, %v562
  %572 = vst.msk [vmem:[%s3 + $0x10] sm:$0xff] %vm569, %v563
  %573 = vst.msk [vmem:[%s3 + $0x18] sm:$0xff] %vm569, %v564
  %574 = vst.msk [vmem:[%s3 + $0x20] sm:$0xff] %vm569, %v565
  %575 = vst.msk [vmem:[%s3 + $0x28] sm:$0xff] %vm569, %v566
  %576 = vst.msk [vmem:[%s3 + $0x30] sm:$0xff] %vm569, %v567
  %577 = vst.msk [vmem:[%s3 + $0x38] sm:$0xff] %vm569, %v568
  // Predicated region
  $region14: #{discriminator_forward.7} parent=0 // pred_check
    _
  $region15: #{discriminator_forward.7} parent=0 // pred_check_branch
    %579 = sbr.rel (0) target = $region17
  $region16: #{discriminator_forward.7} parent=0 // pred_region
    _
  $region17: #{discriminator_forward.7} parent=0 // pred_fallthru
    _
  // Predicated region
  $region18: #{discriminator_forward.7} parent=0 // pred_check
    _
  $region19: #{discriminator_forward.7} parent=0 // pred_check_branch
    %581 = sbr.rel (0) target = $region21
  $region20: #{discriminator_forward.7} parent=0 // pred_region
    _
  $region21: #{discriminator_forward.7} parent=0 // pred_fallthru
    _

</llo_original>
